<compile_context>
chip_gen: v7x
topology: tpu7x:2x2x1
jax: 0.10.0
libtpu: 0.0.40
codegen_flags: <defaults>
</compile_context>

<pallas_src>
import functools

import jax
import jax.numpy as jnp
from jax.experimental import pallas as pl
from jax.experimental.pallas import tpu as pltpu

# ----- small, module-consistent shapes -----
B = 2            # batch
C_IN = 3         # image channels
IMG = 16         # image spatial size
PATCH = 4
S_IMG = (IMG // PATCH) ** 2   # 16 encoder tokens
H_ENC = 32       # dinov2-small hidden (scaled down from 384)
D = 32           # gpt2 n_embd (scaled down from 768)
T = 8            # caption length
L = T + 1        # [image prefix token] + caption
N_SHIFT = B * (L - 1)   # flattened shifted positions (multiple of 8)
V = 512          # vocab size (scaled down from 50257)

ALPHA = 2.0
LAMBDA_CONTRASTIVE = 0.1
TEMPERATURE = 0.1
EPS = 1e-12      # F.normalize eps

# V tile for the streaming LM-head kernel (lane-dense: multiple of 128).
# TODO(synk): production sizing (V=50257 padded, D=768, bf16 weights):
#   v5e : TILE_V ~ 4096  (16 MiB default scoped VMEM, slowest HBM -> bf16 mandatory)
#   v6e : TILE_V = 8192  (or 16384 with raised vmem_limit_bytes) under 128 MiB VMEM
#   v7x : TILE_V ~ 4096-8192 (only 64 MiB VMEM); add a parallel N grid axis
#         (dimension_semantics=("parallel","arbitrary")) to use both TensorCores,
#         and optionally store wte in fp8.  Sweep pl.Buffered(3) on the wte spec
#         only if the profile shows exposed DMA.
TILE_V = 128
assert V % TILE_V == 0


def _vmem_spec():
    return pl.BlockSpec(memory_space=pltpu.MemorySpace.VMEM)


def _smem_spec():
    return pl.BlockSpec(memory_space=pltpu.MemorySpace.SMEM)


def _l2norm(x, axis):
    # F.normalize: x / max(||x||, eps)  -> x * rsqrt(max(sumsq, eps^2)) (EUP path)
    ss = jnp.sum(x * x, axis=axis, keepdims=True)
    return x * jax.lax.rsqrt(jnp.maximum(ss, EPS * EPS))


# ---------------------------------------------------------------------------
# Kernel AB (fused): image_embeds = alpha * proj(mean_seq(enc)) + contrastive loss
#   - 1/S_IMG folded into w1 (sum-pool in kernel), alpha folded into w2/b2
#   - 1/TEMPERATURE folded into the (B, D) text embeds instead of dividing logits
#   - single F.normalize on image_embeds (second normalize is idempotent)
#   - text normalize over dim=1 (sequence axis) exactly as the PyTorch module does
# ---------------------------------------------------------------------------
def fused_img_contrastive_kernel(enc_ref, w1_ref, b1_ref, w2_ref, b2_ref, txt_ref,
                                 img_out_ref, closs_ref):
    # proj pipeline (mean folded into w1, alpha folded into w2/b2)
    pooled_sum = jnp.sum(enc_ref[...], axis=1)                                   # (B, H_ENC)
    h = jnp.dot(pooled_sum, w1_ref[...], preferred_element_type=jnp.float32) + b1_ref[...]
    h = jnp.maximum(h, 0.0)                                                      # ReLU
    img = jnp.dot(h, w2_ref[...], preferred_element_type=jnp.float32) + b2_ref[...]  # (B, D)
    img_out_ref[...] = img

    # contrastive_criterion(F.normalize(img, dim=1), F.normalize(txt, dim=1))
    ie = _l2norm(img, axis=1)                          # (B, D)  (single norm; 2nd is idempotent)
    txt_n = _l2norm(txt_ref[...], axis=1)              # F.normalize(text_embeds, dim=1): SEQ axis
    te = _l2norm(jnp.mean(txt_n, axis=1), axis=1)      # (B, D)
    te = te * jnp.float32(1.0 / TEMPERATURE)           # fold 1/T into te (free, (B,D) only)

    logits = jax.lax.dot_general(
        ie, te, (((1,), (1,)), ((), ())),
        preferred_element_type=jnp.float32)                                      # (B, B)

    m = jnp.max(logits, axis=1, keepdims=True)
    lse = m + jnp.log(jnp.sum(jnp.exp(logits - m), axis=1, keepdims=True))       # (B, 1)
    rows = jax.lax.broadcasted_iota(jnp.int32, logits.shape, 0)
    cols = jax.lax.broadcasted_iota(jnp.int32, logits.shape, 1)
    diag = jnp.sum(jnp.where(rows == cols, logits, 0.0), axis=1, keepdims=True)  # (B, 1)
    closs_ref[0, 0] = jnp.mean(lse - diag)             # CE with targets = arange(B)


def image_and_contrastive(enc, w1s, b1, w2a, b2a, text_embeds):
    return pl.pallas_call(
        fused_img_contrastive_kernel,
        out_shape=(jax.ShapeDtypeStruct((B, D), jnp.float32),
                   jax.ShapeDtypeStruct((1, 1), jnp.float32)),
        in_specs=[_vmem_spec() for _ in range(6)],
        out_specs=(_vmem_spec(), _smem_spec()),
    )(enc, w1s, b1, w2a, b2a, text_embeds)


# ---------------------------------------------------------------------------
# Kernel C (V-tiled streaming): LM head + shifted CE + lambda-weighted total loss
#   - grid over V; each step streams a (TILE_V, D) bf16 slice of the UNtransposed
#     wte and contracts via dot_general -> (N, TILE_V) logits, lane-dense on V
#   - online LSE: running max m_ref and running sum l_ref in VMEM scratch,
#     init at v==0 and finalize at the last V step with pl.when
#   - target logits / -100 mask precomputed in the wrapper (no labels in-kernel)
# ---------------------------------------------------------------------------
def lm_head_loss_kernel(h_ref, wte_ref, tgt_ref, valid_ref, closs_ref, out_ref,
                        m_ref, l_ref):
    v = pl.program_id(0)

    @pl.when(v == 0)
    def _():
        m_ref[...] = jnp.full(m_ref.shape, -jnp.inf, jnp.float32)
        l_ref[...] = jnp.zeros(l_ref.shape, jnp.float32)

    # (N, TILE_V) logits tile: contract D; wte stays (TILE_V, D) -> no HBM transpose,
    # bf16 inputs with f32 MXU accumulation.
    logits = jax.lax.dot_general(
        h_ref[...], wte_ref[...], (((1,), (1,)), ((), ())),
        preferred_element_type=jnp.float32)

    m_prev = m_ref[...]
    m_new = jnp.maximum(m_prev, jnp.max(logits, axis=1, keepdims=True))
    l_ref[...] = (l_ref[...] * jnp.exp(m_prev - m_new)
                  + jnp.sum(jnp.exp(logits - m_new), axis=1, keepdims=True))
    m_ref[...] = m_new

    @pl.when(v == pl.num_programs(0) - 1)
    def _():
        lse = m_ref[...] + jnp.log(l_ref[...])                                   # (N, 1)
        valid = valid_ref[...]                                                   # (N, 1)
        ce_sum = jnp.sum(valid * (lse - tgt_ref[...]))
        count = jnp.maximum(jnp.sum(valid), 1.0)                                 # guard 0/0
        out_ref[0, 0] = ce_sum / count + LAMBDA_CONTRASTIVE * closs_ref[0, 0]


def total_loss_call(shift_hidden, wte, shift_labels, contrastive_loss):
    n, d = shift_hidden.shape
    assert wte.shape == (V, D)

    # bf16 streaming dtype for the DMA-bound weight/activation path; f32 accumulate.
    h_bf16 = shift_hidden.astype(jnp.bfloat16)
    wte_bf16 = wte.astype(jnp.bfloat16)

    # Target logit per row = h . wte[label] via an embedding gather (same bf16 path
    # as the kernel matmul) -> no integer labels / one-hot inside the streaming loop.
    valid = shift_labels >= 0                                       # ignore_index=-100
    safe_lbl = jnp.where(valid, shift_labels, 0)
    tgt_rows = jnp.take(wte_bf16, safe_lbl, axis=0)                 # (N, D) bf16
    tgt = jnp.einsum("nd,nd->n", h_bf16, tgt_rows,
                     preferred_element_type=jnp.float32)
    tgt = jnp.where(valid, tgt, 0.0)[:, None].astype(jnp.float32)   # (N, 1)
    valid_f = valid.astype(jnp.float32)[:, None]                    # (N, 1)

    smem = pltpu.MemorySpace.SMEM
    out = pl.pallas_call(
        lm_head_loss_kernel,
        grid=(V // TILE_V,),
        in_specs=[
            pl.BlockSpec((n, d), lambda v: (0, 0)),                 # h resident
            pl.BlockSpec((TILE_V, d), lambda v: (v, 0)),            # streamed wte slice
            pl.BlockSpec((n, 1), lambda v: (0, 0)),                 # tgt
            pl.BlockSpec((n, 1), lambda v: (0, 0)),                 # valid
            pl.BlockSpec((1, 1), lambda v: (0, 0), memory_space=smem),
        ],
        out_specs=pl.BlockSpec((1, 1), lambda v: (0, 0), memory_space=smem),
        out_shape=jax.ShapeDtypeStruct((1, 1), jnp.float32),
        scratch_shapes=[pltpu.VMEM((n, 1), jnp.float32),            # running max m
                        pltpu.VMEM((n, 1), jnp.float32)],           # running sum l
        compiler_params=pltpu.CompilerParams(
            dimension_semantics=("arbitrary",)),                    # V is a reduction axis
    )(h_bf16, wte_bf16, tgt, valid_f, contrastive_loss)
    return out


# ---------------------------------------------------------------------------
# Plain-JAX glue / deterministic stand-ins for the pretrained submodules
# ---------------------------------------------------------------------------
def dino_standin(pixel_values, patch_w):
    # TODO(synk): pretrained DINOv2 ViT replaced by a deterministic patch-embedding stand-in.
    Bx, C, H, W = pixel_values.shape
    p = PATCH
    x = pixel_values.reshape(Bx, C, H // p, p, W // p, p)
    x = x.transpose(0, 2, 4, 1, 3, 5).reshape(Bx, (H // p) * (W // p), C * p * p)
    return x @ patch_w                                    # (B, S_IMG, H_ENC)


def gpt2_standin_body(params, inputs_embeds):
    # TODO(synk): pretrained GPT2 transformer replaced by a 1-layer synthetic causal stand-in.
    Bx, Lx, Dx = inputs_embeds.shape
    h = inputs_embeds + params["wpe"][:Lx][None]

    def ln(x, g, b):
        mu = x.mean(-1, keepdims=True)
        var = ((x - mu) ** 2).mean(-1, keepdims=True)
        return (x - mu) / jnp.sqrt(var + 1e-5) * g + b

    x = ln(h, params["ln1_g"], params["ln1_b"])
    qkv = x @ params["w_qkv"] + params["b_qkv"]
    q, k, v = jnp.split(qkv, 3, axis=-1)
    att = jnp.einsum("bqd,bkd->bqk", q, k) / jnp.sqrt(jnp.float32(Dx))
    mask = jnp.tril(jnp.ones((Lx, Lx), bool))
    att = jnp.where(mask[None], att, -1e9)
    att = jax.nn.softmax(att, axis=-1)
    a = jnp.einsum("bqk,bkd->bqd", att, v) @ params["w_o"] + params["b_o"]
    h = h + a
    x = ln(h, params["ln2_g"], params["ln2_b"])
    m = jax.nn.gelu(x @ params["w_fc"] + params["b_fc"]) @ params["w_proj"] + params["b_proj"]
    h = h + m
    return ln(h, params["lnf_g"], params["lnf_b"])


def init_params(key):
    ks = jax.random.split(key, 9)
    s = 0.02
    f32 = jnp.float32
    return {
        "patch_w": s * jax.random.normal(ks[0], (C_IN * PATCH * PATCH, H_ENC), f32),
        "proj_w1": s * jax.random.normal(ks[1], (H_ENC, D), f32),
        "proj_b1": jnp.zeros((1, D), f32),
        "proj_w2": s * jax.random.normal(ks[2], (D, D), f32),
        "proj_b2": jnp.zeros((1, D), f32),
        "wte": s * jax.random.normal(ks[3], (V, D), f32),
        "wpe": s * jax.random.normal(ks[4], (L, D), f32),
        "ln1_g": jnp.ones((D,), f32), "ln1_b": jnp.zeros((D,), f32),
        "w_qkv": s * jax.random.normal(ks[5], (D, 3 * D), f32),
        "b_qkv": jnp.zeros((3 * D,), f32),
        "w_o": s * jax.random.normal(ks[6], (D, D), f32),
        "b_o": jnp.zeros((D,), f32),
        "ln2_g": jnp.ones((D,), f32), "ln2_b": jnp.zeros((D,), f32),
        "w_fc": s * jax.random.normal(ks[7], (D, 4 * D), f32),
        "b_fc": jnp.zeros((4 * D,), f32),
        "w_proj": s * jax.random.normal(ks[8], (4 * D, D), f32),
        "b_proj": jnp.zeros((D,), f32),
        "lnf_g": jnp.ones((D,), f32), "lnf_b": jnp.zeros((D,), f32),
    }


def dino_gpt_forward(params, pixel_values, input_ids):
    # ----- encoder -----
    enc_hidden = dino_standin(pixel_values, params["patch_w"])           # (B, S_IMG, H_ENC)

    # Fold constants into the proj weights (exact, since the ops are linear):
    #   mean over S_IMG tokens -> sum-pool in kernel with w1 / S_IMG
    #   alpha * (h @ w2 + b2)  -> h @ (alpha*w2) + alpha*b2
    w1s = params["proj_w1"] * (1.0 / S_IMG)
    w2a = params["proj_w2"] * ALPHA
    b2a = params["proj_b2"] * ALPHA

    # text_embeds = wte(input_ids)   (embedding gather = glue)
    text_embeds = jnp.take(params["wte"], input_ids, axis=0)             # (B, T, D)

    # [Pallas kernel AB] image_embeds + contrastive loss in one launch
    image_embeds, contrastive_loss = image_and_contrastive(
        enc_hidden, w1s, params["proj_b1"], w2a, b2a, text_embeds)

    inputs_embeds = jnp.concatenate(
        [image_embeds[:, None, :], text_embeds], axis=1)                 # (B, L, D)

    # ----- decoder transformer body (stand-in) -----
    hidden = gpt2_standin_body(params, inputs_embeds)                    # (B, L, D)

    # labels = [-100 | input_ids]; GPT2LMHeadModel shifts internally:
    #   shift_logits = logits[:, :-1], shift_labels = labels[:, 1:] = input_ids
    shift_hidden = hidden[:, :-1, :].reshape(N_SHIFT, D)                 # slice input, not logits
    shift_labels = input_ids.astype(jnp.int32).reshape(N_SHIFT)

    # [Pallas kernel C] V-tiled streaming LM-head CE + lambda-weighted total loss
    total_loss = total_loss_call(shift_hidden, params["wte"], shift_labels,
                                 contrastive_loss)
    return total_loss[0, 0]


if __name__ == "__main__":
    key = jax.random.PRNGKey(0)
    k_params, k_img, k_ids = jax.random.split(key, 3)
    params = init_params(k_params)
    pixel_values = jax.random.normal(k_img, (B, C_IN, IMG, IMG), jnp.float32)
    input_ids = jax.random.randint(k_ids, (B, T), 0, V, dtype=jnp.int32)

    loss = jax.jit(functools.partial(dino_gpt_forward, params))(pixel_values, input_ids)
    jax.block_until_ready(loss)
    print("KERNEL_OK")
</pallas_src>

<mosaic_0001>
module attributes {stable_mosaic.version = 11 : i64} {
  func.func @fused_img_contrastive_kernel(%arg0: memref<2x16x32xf32, #tpu.memory_space<vmem>>, %arg1: memref<32x32xf32, #tpu.memory_space<vmem>>, %arg2: memref<1x32xf32, #tpu.memory_space<vmem>>, %arg3: memref<32x32xf32, #tpu.memory_space<vmem>>, %arg4: memref<1x32xf32, #tpu.memory_space<vmem>>, %arg5: memref<2x8x32xf32, #tpu.memory_space<vmem>>, %arg6: memref<2x32xf32, #tpu.memory_space<vmem>>, %arg7: memref<1x1xf32, #tpu.memory_space<smem>>) attributes {dimension_semantics = [], scalar_prefetch = 0 : i64, scratch_operands = 0 : i64, tpu.core_type = #tpu.core_type<tc>} {
    %c0 = arith.constant 0 : index
    %c0_0 = arith.constant 0 : index
    %c0_1 = arith.constant 0 : index
    %0 = vector.load %arg0[%c0, %c0_0, %c0_1] : memref<2x16x32xf32, #tpu.memory_space<vmem>>, vector<2x16x32xf32>
    %cst = arith.constant dense<0.000000e+00> : vector<2x32xf32>
    %1 = vector.multi_reduction <add>, %0, %cst [1] : vector<2x16x32xf32> to vector<2x32xf32>
    %c0_2 = arith.constant 0 : index
    %c0_3 = arith.constant 0 : index
    %2 = vector.load %arg1[%c0_2, %c0_3] : memref<32x32xf32, #tpu.memory_space<vmem>>, vector<32x32xf32>
    %cst_4 = arith.constant dense<0.000000e+00> : vector<2x32xf32>
    %3 = tpu.matmul %1, %2, %cst_4 {dimension_numbers = #tpu.dot_dimension_numbers<[1], [0], [0], [1], [0, 0, 1, 1], [], []>} : vector<2x32xf32>, vector<32x32xf32>, vector<2x32xf32> -> vector<2x32xf32>
    %c0_5 = arith.constant 0 : index
    %c0_6 = arith.constant 0 : index
    %4 = vector.load %arg2[%c0_5, %c0_6] : memref<1x32xf32, #tpu.memory_space<vmem>>, vector<1x32xf32>
    %5 = vector.broadcast %4 : vector<1x32xf32> to vector<2x32xf32>
    %6 = arith.addf %3, %5 : vector<2x32xf32>
    %cst_7 = arith.constant 0.000000e+00 : f32
    %7 = vector.broadcast %cst_7 : f32 to vector<2x32xf32>
    %8 = arith.maximumf %6, %7 : vector<2x32xf32>
    %c0_8 = arith.constant 0 : index
    %c0_9 = arith.constant 0 : index
    %9 = vector.load %arg3[%c0_8, %c0_9] : memref<32x32xf32, #tpu.memory_space<vmem>>, vector<32x32xf32>
    %cst_10 = arith.constant dense<0.000000e+00> : vector<2x32xf32>
    %10 = tpu.matmul %8, %9, %cst_10 {dimension_numbers = #tpu.dot_dimension_numbers<[1], [0], [0], [1], [0, 0, 1, 1], [], []>} : vector<2x32xf32>, vector<32x32xf32>, vector<2x32xf32> -> vector<2x32xf32>
    %c0_11 = arith.constant 0 : index
    %c0_12 = arith.constant 0 : index
    %11 = vector.load %arg4[%c0_11, %c0_12] : memref<1x32xf32, #tpu.memory_space<vmem>>, vector<1x32xf32>
    %12 = vector.broadcast %11 : vector<1x32xf32> to vector<2x32xf32>
    %13 = arith.addf %10, %12 : vector<2x32xf32>
    %c0_13 = arith.constant 0 : index
    %c0_14 = arith.constant 0 : index
    %14 = vector.load %arg6[%c0_13, %c0_14] : memref<2x32xf32, #tpu.memory_space<vmem>>, vector<2x32xf32>
    tpu.vector_store %arg6[%c0_13, %c0_14], %13 {strides = array<i32>} : memref<2x32xf32, #tpu.memory_space<vmem>>, vector<2x32xf32>,
    %15 = arith.mulf %13, %13 : vector<2x32xf32>
    %cst_15 = arith.constant dense<0.000000e+00> : vector<2xf32>
    %16 = vector.multi_reduction <add>, %15, %cst_15 [1] : vector<2x32xf32> to vector<2xf32>
    %17 = vector.shape_cast %16 : vector<2xf32> to vector<2x1xf32>
    %cst_16 = arith.constant 1.000000e-24 : f32
    %18 = vector.broadcast %cst_16 : f32 to vector<2x1xf32>
    %19 = arith.maximumf %17, %18 : vector<2x1xf32>
    %20 = math.rsqrt %19 : vector<2x1xf32>
    %21 = vector.broadcast %20 : vector<2x1xf32> to vector<2x32xf32>
    %22 = arith.mulf %13, %21 : vector<2x32xf32>
    %c0_17 = arith.constant 0 : index
    %c0_18 = arith.constant 0 : index
    %c0_19 = arith.constant 0 : index
    %23 = vector.load %arg5[%c0_17, %c0_18, %c0_19] : memref<2x8x32xf32, #tpu.memory_space<vmem>>, vector<2x8x32xf32>
    %24 = arith.mulf %23, %23 : vector<2x8x32xf32>
    %cst_20 = arith.constant dense<0.000000e+00> : vector<2x32xf32>
    %25 = vector.multi_reduction <add>, %24, %cst_20 [1] : vector<2x8x32xf32> to vector<2x32xf32>
    %26 = vector.shape_cast %25 : vector<2x32xf32> to vector<2x1x32xf32>
    %cst_21 = arith.constant 1.000000e-24 : f32
    %27 = vector.broadcast %cst_21 : f32 to vector<2x1x32xf32>
    %28 = arith.maximumf %26, %27 : vector<2x1x32xf32>
    %29 = math.rsqrt %28 : vector<2x1x32xf32>
    %30 = vector.broadcast %29 : vector<2x1x32xf32> to vector<2x8x32xf32>
    %31 = arith.mulf %23, %30 : vector<2x8x32xf32>
    %cst_22 = arith.constant dense<0.000000e+00> : vector<2x32xf32>
    %32 = vector.multi_reduction <add>, %31, %cst_22 [1] : vector<2x8x32xf32> to vector<2x32xf32>
    %cst_23 = arith.constant 8.000000e+00 : f32
    %33 = vector.broadcast %cst_23 : f32 to vector<2x32xf32>
    %34 = arith.divf %32, %33 : vector<2x32xf32>
    %35 = arith.mulf %34, %34 : vector<2x32xf32>
    %cst_24 = arith.constant dense<0.000000e+00> : vector<2xf32>
    %36 = vector.multi_reduction <add>, %35, %cst_24 [1] : vector<2x32xf32> to vector<2xf32>
    %37 = vector.shape_cast %36 : vector<2xf32> to vector<2x1xf32>
    %cst_25 = arith.constant 1.000000e-24 : f32
    %38 = vector.broadcast %cst_25 : f32 to vector<2x1xf32>
    %39 = arith.maximumf %37, %38 : vector<2x1xf32>
    %40 = math.rsqrt %39 : vector<2x1xf32>
    %41 = vector.broadcast %40 : vector<2x1xf32> to vector<2x32xf32>
    %42 = arith.mulf %34, %41 : vector<2x32xf32>
    %cst_26 = arith.constant 1.000000e+01 : f32
    %43 = vector.broadcast %cst_26 : f32 to vector<2x32xf32>
    %44 = arith.mulf %42, %43 : vector<2x32xf32>
    %cst_27 = arith.constant dense<0.000000e+00> : vector<2x2xf32>
    %45 = tpu.matmul %22, %44, %cst_27 {dimension_numbers = #tpu.dot_dimension_numbers<[1], [1], [0], [0], [0, 0, 1, 0], [], []>} : vector<2x32xf32>, vector<2x32xf32>, vector<2x2xf32> -> vector<2x2xf32>
    %cst_28 = arith.constant dense<0xFF800000> : vector<2xf32>
    %46 = vector.multi_reduction <maximumf>, %45, %cst_28 [1] : vector<2x2xf32> to vector<2xf32>
    %47 = vector.shape_cast %46 : vector<2xf32> to vector<2x1xf32>
    %48 = vector.broadcast %47 : vector<2x1xf32> to vector<2x2xf32>
    %49 = arith.subf %45, %48 : vector<2x2xf32>
    %50 = math.exp %49 : vector<2x2xf32>
    %cst_29 = arith.constant dense<0.000000e+00> : vector<2xf32>
    %51 = vector.multi_reduction <add>, %50, %cst_29 [1] : vector<2x2xf32> to vector<2xf32>
    %52 = vector.shape_cast %51 : vector<2xf32> to vector<2x1xf32>
    %53 = math.log %52 : vector<2x1xf32>
    %54 = arith.addf %47, %53 : vector<2x1xf32>
    %55 = tpu.iota {dimensions = array<i32: 0>} : vector<2x2xi32>
    %56 = tpu.iota {dimensions = array<i32: 1>} : vector<2x2xi32>
    %57 = arith.cmpi eq, %55, %56 : vector<2x2xi32>
    %cst_30 = arith.constant 0.000000e+00 : f32
    %58 = vector.broadcast %cst_30 : f32 to vector<2x2xf32>
    %59 = arith.select %57, %45, %58 : vector<2x2xi1>, vector<2x2xf32>
    %cst_31 = arith.constant dense<0.000000e+00> : vector<2xf32>
    %60 = vector.multi_reduction <add>, %59, %cst_31 [1] : vector<2x2xf32> to vector<2xf32>
    %61 = vector.shape_cast %60 : vector<2xf32> to vector<2x1xf32>
    %62 = arith.subf %54, %61 : vector<2x1xf32>
    %63 = vector.shape_cast %62 : vector<2x1xf32> to vector<1x2x1xf32>
    %cst_32 = arith.constant dense<0.000000e+00> : vector<1xf32>
    %64 = vector.multi_reduction <add>, %63, %cst_32 [1, 2] : vector<1x2x1xf32> to vector<1xf32>
    %65 = vector.shape_cast %64 : vector<1xf32> to vector<1x1x1xf32>
    %66 = vector.extract %65[0, 0, 0] : f32 from vector<1x1x1xf32>
    %cst_33 = arith.constant 2.000000e+00 : f32
    %67 = arith.divf %66, %cst_33 : f32
    %c0_34 = arith.constant 0 : index
    %c0_35 = arith.constant 0 : index
    %68 = memref.load %arg7[%c0_34, %c0_35] : memref<1x1xf32, #tpu.memory_space<smem>>
    memref.store %67, %arg7[%c0_34, %c0_35] : memref<1x1xf32, #tpu.memory_space<smem>>
    return
  }
}

module attributes {stable_mosaic.version = 11 : i64} {
  func.func @lm_head_loss_kernel(%arg0: i32, %arg1: memref<16x32xbf16, #tpu.memory_space<vmem>>, %arg2: memref<128x32xbf16, #tpu.memory_space<vmem>>, %arg3: memref<16x1xf32, #tpu.memory_space<vmem>>, %arg4: memref<16x1xf32, #tpu.memory_space<vmem>>, %arg5: memref<1x1xf32, #tpu.memory_space<smem>>, %arg6: memref<1x1xf32, #tpu.memory_space<smem>>, %arg7: memref<16x1xf32, #tpu.memory_space<vmem>>, %arg8: memref<16x1xf32, #tpu.memory_space<vmem>>) attributes {dimension_semantics = [#tpu.dimension_semantics<arbitrary>], iteration_bounds = array<i64: 4>, scalar_prefetch = 0 : i64, scratch_operands = 2 : i64, tpu.core_type = #tpu.core_type<tc>, window_params = [{pipeline_mode = #tpu.pipeline_mode<synchronous>, transform_indices = @transform_0, window_bounds = array<i64: 16, 32>}, {transform_indices = @transform_1, window_bounds = array<i64: 128, 32>}, {pipeline_mode = #tpu.pipeline_mode<synchronous>, transform_indices = @transform_2, window_bounds = array<i64: 16, 1>}, {pipeline_mode = #tpu.pipeline_mode<synchronous>, transform_indices = @transform_3, window_bounds = array<i64: 16, 1>}, {transform_indices = @transform_4, window_bounds = array<i64: 1, 1>}, {transform_indices = @transform_5, window_bounds = array<i64: 1, 1>}]} {
    %c0_i32 = arith.constant 0 : i32
    %0 = arith.cmpi eq, %arg0, %c0_i32 : i32
    %1 = arith.extui %0 : i1 to i32
    %c0_i32_0 = arith.constant 0 : i32
    %2 = arith.cmpi ne, %1, %c0_i32_0 : i32
    scf.if %2 {
      %cst_15 = arith.constant 0xFF800000 : f32
      %25 = vector.broadcast %cst_15 : f32 to vector<16x1xf32>
      %c0_16 = arith.constant 0 : index
      %c0_17 = arith.constant 0 : index
      %26 = vector.load %arg7[%c0_16, %c0_17] : memref<16x1xf32, #tpu.memory_space<vmem>>, vector<16x1xf32>
      tpu.vector_store %arg7[%c0_16, %c0_17], %25 {strides = array<i32>} : memref<16x1xf32, #tpu.memory_space<vmem>>, vector<16x1xf32>,
      %cst_18 = arith.constant 0.000000e+00 : f32
      %27 = vector.broadcast %cst_18 : f32 to vector<16x1xf32>
      %c0_19 = arith.constant 0 : index
      %c0_20 = arith.constant 0 : index
      %28 = vector.load %arg8[%c0_19, %c0_20] : memref<16x1xf32, #tpu.memory_space<vmem>>, vector<16x1xf32>
      tpu.vector_store %arg8[%c0_19, %c0_20], %27 {strides = array<i32>} : memref<16x1xf32, #tpu.memory_space<vmem>>, vector<16x1xf32>,
    } else {
    }
    %c0 = arith.constant 0 : index
    %c0_1 = arith.constant 0 : index
    %3 = vector.load %arg1[%c0, %c0_1] : memref<16x32xbf16, #tpu.memory_space<vmem>>, vector<16x32xbf16>
    %c0_2 = arith.constant 0 : index
    %c0_3 = arith.constant 0 : index
    %4 = vector.load %arg2[%c0_2, %c0_3] : memref<128x32xbf16, #tpu.memory_space<vmem>>, vector<128x32xbf16>
    %cst = arith.constant dense<0.000000e+00> : vector<16x128xf32>
    %5 = tpu.matmul %3, %4, %cst {dimension_numbers = #tpu.dot_dimension_numbers<[1], [1], [0], [0], [0, 0, 1, 0], [], []>} : vector<16x32xbf16>, vector<128x32xbf16>, vector<16x128xf32> -> vector<16x128xf32>
    %c0_4 = arith.constant 0 : index
    %c0_5 = arith.constant 0 : index
    %6 = vector.load %arg7[%c0_4, %c0_5] : memref<16x1xf32, #tpu.memory_space<vmem>>, vector<16x1xf32>
    %cst_6 = arith.constant dense<0xFF800000> : vector<16xf32>
    %7 = vector.multi_reduction <maximumf>, %5, %cst_6 [1] : vector<16x128xf32> to vector<16xf32>
    %8 = vector.shape_cast %7 : vector<16xf32> to vector<16x1xf32>
    %9 = arith.maximumf %6, %8 : vector<16x1xf32>
    %c0_7 = arith.constant 0 : index
    %c0_8 = arith.constant 0 : index
    %10 = vector.load %arg8[%c0_7, %c0_8] : memref<16x1xf32, #tpu.memory_space<vmem>>, vector<16x1xf32>
    %11 = arith.subf %6, %9 : vector<16x1xf32>
    %12 = math.exp %11 : vector<16x1xf32>
    %13 = arith.mulf %10, %12 : vector<16x1xf32>
    %14 = vector.broadcast %9 : vector<16x1xf32> to vector<16x128xf32>
    %15 = arith.subf %5, %14 : vector<16x128xf32>
    %16 = math.exp %15 : vector<16x128xf32>
    %cst_9 = arith.constant dense<0.000000e+00> : vector<16xf32>
    %17 = vector.multi_reduction <add>, %16, %cst_9 [1] : vector<16x128xf32> to vector<16xf32>
    %18 = vector.shape_cast %17 : vector<16xf32> to vector<16x1xf32>
    %19 = arith.addf %13, %18 : vector<16x1xf32>
    %c0_10 = arith.constant 0 : index
    %c0_11 = arith.constant 0 : index
    %20 = vector.load %arg8[%c0_10, %c0_11] : memref<16x1xf32, #tpu.memory_space<vmem>>, vector<16x1xf32>
    tpu.vector_store %arg8[%c0_10, %c0_11], %19 {strides = array<i32>} : memref<16x1xf32, #tpu.memory_space<vmem>>, vector<16x1xf32>,
    %c0_12 = arith.constant 0 : index
    %c0_13 = arith.constant 0 : index
    %21 = vector.load %arg7[%c0_12, %c0_13] : memref<16x1xf32, #tpu.memory_space<vmem>>, vector<16x1xf32>
    tpu.vector_store %arg7[%c0_12, %c0_13], %9 {strides = array<i32>} : memref<16x1xf32, #tpu.memory_space<vmem>>, vector<16x1xf32>,
    %c3_i32 = arith.constant 3 : i32
    %22 = arith.cmpi eq, %arg0, %c3_i32 : i32
    %23 = arith.extui %22 : i1 to i32
    %c0_i32_14 = arith.constant 0 : i32
    %24 = arith.cmpi ne, %23, %c0_i32_14 : i32
    scf.if %24 {
      %c0_15 = arith.constant 0 : index
      %c0_16 = arith.constant 0 : index
      %25 = vector.load %arg7[%c0_15, %c0_16] : memref<16x1xf32, #tpu.memory_space<vmem>>, vector<16x1xf32>
      %c0_17 = arith.constant 0 : index
      %c0_18 = arith.constant 0 : index
      %26 = vector.load %arg8[%c0_17, %c0_18] : memref<16x1xf32, #tpu.memory_space<vmem>>, vector<16x1xf32>
      %27 = math.log %26 : vector<16x1xf32>
      %28 = arith.addf %25, %27 : vector<16x1xf32>
      %c0_19 = arith.constant 0 : index
      %c0_20 = arith.constant 0 : index
      %29 = vector.load %arg4[%c0_19, %c0_20] : memref<16x1xf32, #tpu.memory_space<vmem>>, vector<16x1xf32>
      %c0_21 = arith.constant 0 : index
      %c0_22 = arith.constant 0 : index
      %30 = vector.load %arg3[%c0_21, %c0_22] : memref<16x1xf32, #tpu.memory_space<vmem>>, vector<16x1xf32>
      %31 = arith.subf %28, %30 : vector<16x1xf32>
      %32 = arith.mulf %29, %31 : vector<16x1xf32>
      %33 = vector.shape_cast %32 : vector<16x1xf32> to vector<1x16x1xf32>
      %cst_23 = arith.constant dense<0.000000e+00> : vector<1xf32>
      %34 = vector.multi_reduction <add>, %33, %cst_23 [1, 2] : vector<1x16x1xf32> to vector<1xf32>
      %35 = vector.shape_cast %34 : vector<1xf32> to vector<1x1x1xf32>
      %36 = vector.extract %35[0, 0, 0] : f32 from vector<1x1x1xf32>
      %37 = vector.shape_cast %29 : vector<16x1xf32> to vector<1x16x1xf32>
      %cst_24 = arith.constant dense<0.000000e+00> : vector<1xf32>
      %38 = vector.multi_reduction <add>, %37, %cst_24 [1, 2] : vector<1x16x1xf32> to vector<1xf32>
      %39 = vector.shape_cast %38 : vector<1xf32> to vector<1x1x1xf32>
      %40 = vector.extract %39[0, 0, 0] : f32 from vector<1x1x1xf32>
      %cst_25 = arith.constant 1.000000e+00 : f32
      %41 = arith.maximumf %40, %cst_25 : f32
      %42 = arith.divf %36, %41 : f32
      %c0_26 = arith.constant 0 : index
      %c0_27 = arith.constant 0 : index
      %43 = memref.load %arg5[%c0_26, %c0_27] : memref<1x1xf32, #tpu.memory_space<smem>>
      %cst_28 = arith.constant 1.000000e-01 : f32
      %44 = arith.mulf %cst_28, %43 : f32
      %45 = arith.addf %42, %44 : f32
      %c0_29 = arith.constant 0 : index
      %c0_30 = arith.constant 0 : index
      %46 = memref.load %arg6[%c0_29, %c0_30] : memref<1x1xf32, #tpu.memory_space<smem>>
      memref.store %45, %arg6[%c0_29, %c0_30] : memref<1x1xf32, #tpu.memory_space<smem>>
    } else {
    }
    return
  }
  func.func @transform_0(%arg0: i32) -> (i32, i32) {
    %c0_i32 = arith.constant 0 : i32
    %c0_i32_0 = arith.constant 0 : i32
    %c0_i32_1 = arith.constant 0 : i32
    return %c0_i32, %c0_i32_0 : i32, i32
  }
  func.func @transform_1(%arg0: i32) -> (i32, i32) {
    %c0_i32 = arith.constant 0 : i32
    %c0_i32_0 = arith.constant 0 : i32
    return %arg0, %c0_i32 : i32, i32
  }
  func.func @transform_2(%arg0: i32) -> (i32, i32) {
    %c0_i32 = arith.constant 0 : i32
    %c0_i32_0 = arith.constant 0 : i32
    %c0_i32_1 = arith.constant 0 : i32
    return %c0_i32, %c0_i32_0 : i32, i32
  }
  func.func @transform_3(%arg0: i32) -> (i32, i32) {
    %c0_i32 = arith.constant 0 : i32
    %c0_i32_0 = arith.constant 0 : i32
    %c0_i32_1 = arith.constant 0 : i32
    return %c0_i32, %c0_i32_0 : i32, i32
  }
  func.func @transform_4(%arg0: i32) -> (i32, i32) {
    %c0_i32 = arith.constant 0 : i32
    %c0_i32_0 = arith.constant 0 : i32
    %c0_i32_1 = arith.constant 0 : i32
    return %c0_i32, %c0_i32_0 : i32, i32
  }
  func.func @transform_5(%arg0: i32) -> (i32, i32) {
    %c0_i32 = arith.constant 0 : i32
    %c0_i32_0 = arith.constant 0 : i32
    %c0_i32_1 = arith.constant 0 : i32
    return %c0_i32, %c0_i32_0 : i32, i32
  }
}

</mosaic_0001>

<llo_original>
// kernel: dino_gpt_forward.2
$region0: #{dino_gpt_forward.2}
  #allocation0 [shape = 'u32[]', space=smem, size = 0x4, offset = 0x4, fixed_abs, tag = 'smem constant byte address 0x4 - core index']
  #allocation1 [shape = 'u32[144,128]{1,0:T(1,128)}', space=vmem, size = 0x12000, scoped, tag = 'internal scratch']
  %s0 = inlined_call_operand.vmem [shape: f32[2,16,32], index: 0, kind: input, shape index: {}]
  %s1 = inlined_call_operand.vmem [shape: f32[32,32], index: 1, kind: input, shape index: {}]
  %s2 = inlined_call_operand.vmem [shape: f32[1,32], index: 2, kind: input, shape index: {}, may-alias: {2,4}]
  %s3 = inlined_call_operand.vmem [shape: f32[32,32], index: 3, kind: input, shape index: {}]
  %s4 = inlined_call_operand.vmem [shape: f32[1,32], index: 4, kind: input, shape index: {}, may-alias: {2,4}]
  %s5 = inlined_call_operand.vmem [shape: f32[2,8,32], index: 5, kind: input, shape index: {}]
  %s6 = inlined_call_operand.vmem [shape: f32[2,32], index: 6, kind: output, shape index: {0}]
  %s7 = inlined_call_operand.hbm [shape: f32[1,1], index: 7, kind: output, shape index: {1}]
  %8 = xla_tuple %s6, %s7
  %s9 = sld [smem:[#allocation0]]
  $region42: #{dino_gpt_forward.2} parent=0
    _
  %s11 = ssub.s32 1, %s9
  %s12 = scalar_select 0, %s11, %s9
  $region1: #{dino_gpt_forward.2} parent=0
    #allocation2 [shape = 'u8[512]{0}', space=smem, size = 0x200, scoped, tag = 'output window, operand 1, single buffered']
    #allocation3 [shape = 's32[1]{0}', space=sflag, size = 0x4, scoped, tag = 'scoped memory for dino_gpt_forward.2']
    %13 = vsyncpa [#allocation3], 0
    // Predicated region
    $region2: #{dino_gpt_forward.2} parent=1 // pred_check
      _
    $region3: #{dino_gpt_forward.2} parent=1 // pred_check_branch
      %15 = sbr.rel (0) target = $region5
    $region4: #{dino_gpt_forward.2} parent=1 // pred_region
      _
    $region5: #{dino_gpt_forward.2} parent=1 // pred_fallthru
      _
    // Predicated region
    $region6: #{dino_gpt_forward.2} parent=1 // pred_check
      _
    $region7: #{dino_gpt_forward.2} parent=1 // pred_check_branch
      %17 = sbr.rel (0) target = $region9
    $region8: #{dino_gpt_forward.2} parent=1 // pred_region
      _
    $region9: #{dino_gpt_forward.2} parent=1 // pred_fallthru
      _
    // Predicated region
    $region10: #{dino_gpt_forward.2} parent=1 // pred_check
      _
    $region11: #{dino_gpt_forward.2} parent=1 // pred_check_branch
      %19 = sbr.rel (0) target = $region13
    $region12: #{dino_gpt_forward.2} parent=1 // pred_region
      _
    $region13: #{dino_gpt_forward.2} parent=1 // pred_fallthru
      _
    // Predicated region
    $region14: #{dino_gpt_forward.2} parent=1 // pred_check
      _
    $region15: #{dino_gpt_forward.2} parent=1 // pred_check_branch
      %21 = sbr.rel (0) target = $region17
    $region16: #{dino_gpt_forward.2} parent=1 // pred_region
      _
    $region17: #{dino_gpt_forward.2} parent=1 // pred_fallthru
      _
    // Predicated region
    $region18: #{dino_gpt_forward.2} parent=1 // pred_check
      _
    $region19: #{dino_gpt_forward.2} parent=1 // pred_check_branch
      %23 = sbr.rel (0) target = $region21
    $region20: #{dino_gpt_forward.2} parent=1 // pred_region
      _
    $region21: #{dino_gpt_forward.2} parent=1 // pred_fallthru
      _
    // Predicated region
    $region22: #{dino_gpt_forward.2} parent=1 // pred_check
      _
    $region23: #{dino_gpt_forward.2} parent=1 // pred_check_branch
      %25 = sbr.rel (0) target = $region25
    $region24: #{dino_gpt_forward.2} parent=1 // pred_region
      _
    $region25: #{dino_gpt_forward.2} parent=1 // pred_fallthru
      _
    %v26 = vld [vmem:[%s0] sm:$0xff]
    %v27 = vld [vmem:[%s0 + $0x8] sm:$0xff]
    %v28 = vld [vmem:[%s0 + $0x10] sm:$0xff]
    %v29 = vld [vmem:[%s0 + $0x18] sm:$0xff]
    %vm30 = vcmask 261120
    %v31 = vsel %vm30, %v26, 0.0
    %v32 = vsel %vm30, %v27, 0.0
    %v33 = vadd.f32 %v31, %v32
    %v34 = vrot.slane %v33, 4
    %v35 = vadd.f32 %v33, %v34
    %v36 = vrot.slane %v35, 2
    %v37 = vadd.f32 %v35, %v36
    %v38 = vrot.slane %v37, 1
    %v39 = vadd.f32 %v37, %v38
    %v40 = vsel %vm30, %v28, 0.0
    %v41 = vsel %vm30, %v29, 0.0
    %v42 = vadd.f32 %v40, %v41
    %v43 = vrot.slane %v42, 4
    %v44 = vadd.f32 %v42, %v43
    %v45 = vrot.slane %v44, 2
    %v46 = vadd.f32 %v44, %v45
    %v47 = vrot.slane %v46, 1
    %v48 = vadd.f32 %v46, %v47
    %v49 = vld [vmem:[%s1] sm:$0xff]
    %v50 = vld [vmem:[%s1 + $0x8] sm:$0xff]
    %v51 = vld [vmem:[%s1 + $0x10] sm:$0xff]
    %v52 = vld [vmem:[%s1 + $0x18] sm:$0xff]
    %v53 = vld [vmem:[%s2] sm:$0x1]
    %v55 = vlaneseq
    %v56 = vshrl.u32 %v55, 7
    %v57 = vsub.s32 0, %v56
    %v58 = vrot.slane %v53, %v57
    %vm62 = vcmask 1041409
    %v63 = vsel %vm62, %v48, %v39
    %v64 = vsel %vm30, %v63, 0
    %66 = vmatprep.subr.mxu0 0.0
    %67 = vmatpush1.msra.mxu0 %v49
    %68 = vmatprep.subr.mxu0 0.0
    %69 = vmatpush1.msra.mxu0 %v50
    %70 = vmatprep.subr.mxu0 0.0
    %71 = vmatpush1.msra.mxu0 %v51
    %72 = vmatprep.subr.mxu0 0.0
    %73 = vmatpush1.msra.mxu0 %v52
    %74 = vmatprep.subr.mxu0 0.0
    %75 = vmatpush1.msra.mxu0 0.0
    %76 = vmatprep.subr.mxu0 0.0
    %77 = vmatpush1.msra.mxu0 0.0
    %78 = vmatprep.subr.mxu0 0.0
    %79 = vmatpush1.msra.mxu0 0.0
    %80 = vmatprep.subr.mxu0 0.0
    %81 = vmatpush1.msra.mxu0 0.0
    %82 = vmatprep.subr.mxu0 0.0
    %83 = vmatpush1.msra.mxu0 0.0
    %84 = vmatprep.subr.mxu0 0.0
    %85 = vmatpush1.msra.mxu0 0.0
    %86 = vmatprep.subr.mxu0 0.0
    %87 = vmatpush1.msra.mxu0 0.0
    %88 = vmatprep.subr.mxu0 0.0
    %89 = vmatpush1.msra.mxu0 0.0
    %90 = vmatprep.subr.mxu0 0.0
    %91 = vmatpush1.msra.mxu0 0.0
    %92 = vmatprep.subr.mxu0 0.0
    %93 = vmatpush1.msra.mxu0 0.0
    %94 = vmatprep.subr.mxu0 0.0
    %95 = vmatpush1.msra.mxu0 0.0
    %96 = vmatprep.subr.mxu0 0.0
    %97 = vmatpush1.msra.mxu0 0.0
    %98 = vmatprep.subr.mxu0 0.0
    %99 = vmatpush1.msra.mxu0 0.0
    %100 = vmatprep.subr.mxu0 0.0
    %101 = vmatpush1.msra.mxu0 0.0
    %102 = vmatprep.subr.mxu0 0.0
    %103 = vmatpush1.msra.mxu0 0.0
    %104 = vmatprep.subr.mxu0 0.0
    %105 = vmatpush1.msra.mxu0 0.0
    %106 = vmatprep.subr.mxu0 0.0
    %107 = vmatpush1.msra.mxu0 0.0
    %108 = vmatprep.subr.mxu0 0.0
    %109 = vmatpush1.msra.mxu0 0.0
    %110 = vmatprep.subr.mxu0 0.0
    %111 = vmatpush1.msra.mxu0 0.0
    %112 = vmatprep.subr.mxu0 0.0
    %113 = vmatpush1.msra.mxu0 0.0
    %114 = vmatprep.subr.mxu0 0.0
    %115 = vmatpush1.msra.mxu0 0.0
    %116 = vmatprep.subr.mxu0 0.0
    %117 = vmatpush1.msra.mxu0 0.0
    %118 = vmatprep.subr.mxu0 0.0
    %119 = vmatpush1.msra.mxu0 0.0
    %120 = vmatprep.subr.mxu0 0.0
    %121 = vmatpush1.msra.mxu0 0.0
    %122 = vmatprep.subr.mxu0 0.0
    %123 = vmatpush1.msra.mxu0 0.0
    %124 = vmatprep.subr.mxu0 0.0
    %125 = vmatpush1.msra.mxu0 0.0
    %126 = vmatprep.subr.mxu0 0.0
    %127 = vmatpush1.msra.mxu0 0.0
    %128 = vmatprep.subr.mxu0 0.0
    %129 = vmatpush1.msra.mxu0 0.0
    %130 = vmatprep.mubr.f32.mxu0 0.0
    %131 = vmatmul.mubr.f32.gmra.mrb[0].mxu0 %v64
    %v132 = vpop.f32.mrb[0].mxu0
    %v133 = vadd.f32 %v58, %v132
    %v134 = vpop.f32.mrb[0].mxu0
    %135 = vdwg.mxu0
    %v136 = vmax.f32 %v133, 0.0
    %v137 = vld [vmem:[%s3] sm:$0xff]
    %v138 = vld [vmem:[%s3 + $0x8] sm:$0xff]
    %v139 = vld [vmem:[%s3 + $0x10] sm:$0xff]
    %v140 = vld [vmem:[%s3 + $0x18] sm:$0xff]
    %v141 = vld [vmem:[%s4] sm:$0x1]
    %v143 = vlaneseq
    %v144 = vshrl.u32 %v143, 7
    %v145 = vsub.s32 0, %v144
    %v146 = vrot.slane %v141, %v145
    %v149 = vsel %vm30, %v136, 0
    %151 = vmatprep.subr.mxu0 0.0
    %152 = vmatpush1.msra.mxu0 %v137
    %153 = vmatprep.subr.mxu0 0.0
    %154 = vmatpush1.msra.mxu0 %v138
    %155 = vmatprep.subr.mxu0 0.0
    %156 = vmatpush1.msra.mxu0 %v139
    %157 = vmatprep.subr.mxu0 0.0
    %158 = vmatpush1.msra.mxu0 %v140
    %159 = vmatprep.subr.mxu0 0.0
    %160 = vmatpush1.msra.mxu0 0.0
    %161 = vmatprep.subr.mxu0 0.0
    %162 = vmatpush1.msra.mxu0 0.0
    %163 = vmatprep.subr.mxu0 0.0
    %164 = vmatpush1.msra.mxu0 0.0
    %165 = vmatprep.subr.mxu0 0.0
    %166 = vmatpush1.msra.mxu0 0.0
    %167 = vmatprep.subr.mxu0 0.0
    %168 = vmatpush1.msra.mxu0 0.0
    %169 = vmatprep.subr.mxu0 0.0
    %170 = vmatpush1.msra.mxu0 0.0
    %171 = vmatprep.subr.mxu0 0.0
    %172 = vmatpush1.msra.mxu0 0.0
    %173 = vmatprep.subr.mxu0 0.0
    %174 = vmatpush1.msra.mxu0 0.0
    %175 = vmatprep.subr.mxu0 0.0
    %176 = vmatpush1.msra.mxu0 0.0
    %177 = vmatprep.subr.mxu0 0.0
    %178 = vmatpush1.msra.mxu0 0.0
    %179 = vmatprep.subr.mxu0 0.0
    %180 = vmatpush1.msra.mxu0 0.0
    %181 = vmatprep.subr.mxu0 0.0
    %182 = vmatpush1.msra.mxu0 0.0
    %183 = vmatprep.subr.mxu0 0.0
    %184 = vmatpush1.msra.mxu0 0.0
    %185 = vmatprep.subr.mxu0 0.0
    %186 = vmatpush1.msra.mxu0 0.0
    %187 = vmatprep.subr.mxu0 0.0
    %188 = vmatpush1.msra.mxu0 0.0
    %189 = vmatprep.subr.mxu0 0.0
    %190 = vmatpush1.msra.mxu0 0.0
    %191 = vmatprep.subr.mxu0 0.0
    %192 = vmatpush1.msra.mxu0 0.0
    %193 = vmatprep.subr.mxu0 0.0
    %194 = vmatpush1.msra.mxu0 0.0
    %195 = vmatprep.subr.mxu0 0.0
    %196 = vmatpush1.msra.mxu0 0.0
    %197 = vmatprep.subr.mxu0 0.0
    %198 = vmatpush1.msra.mxu0 0.0
    %199 = vmatprep.subr.mxu0 0.0
    %200 = vmatpush1.msra.mxu0 0.0
    %201 = vmatprep.subr.mxu0 0.0
    %202 = vmatpush1.msra.mxu0 0.0
    %203 = vmatprep.subr.mxu0 0.0
    %204 = vmatpush1.msra.mxu0 0.0
    %205 = vmatprep.subr.mxu0 0.0
    %206 = vmatpush1.msra.mxu0 0.0
    %207 = vmatprep.subr.mxu0 0.0
    %208 = vmatpush1.msra.mxu0 0.0
    %209 = vmatprep.subr.mxu0 0.0
    %210 = vmatpush1.msra.mxu0 0.0
    %211 = vmatprep.subr.mxu0 0.0
    %212 = vmatpush1.msra.mxu0 0.0
    %213 = vmatprep.subr.mxu0 0.0
    %214 = vmatpush1.msra.mxu0 0.0
    %215 = vmatprep.mubr.f32.mxu0 0.0
    %216 = vmatmul.mubr.f32.gmra.mrb[0].mxu0 %v149
    %v217 = vpop.f32.mrb[0].mxu0
    %v218 = vadd.f32 %v146, %v217
    %v219 = vpop.f32.mrb[0].mxu0
    %220 = vdwg.mxu0
    %vm221 = vcmask 254976
    %222 = vst.msk [vmem:[%s6] sm:$0x3] %vm221, %v218
    %v223 = vmul.f32 %v218, %v218
    %v224 = vsel %vm221, %v223, 0.0
    %225 = vadd.xlane.f32.xlu0 %v224
    %v226 = vpop.xlane.xlu0 %225
    %v227 = vmax.f32 %v226, 1e-24
    %v228 = vrsqrt.pop %v227
    %v229 = vmul.f32 %v218, %v228
    %v230 = vld [vmem:[%s5] sm:$0xff]
    %v231 = vld [vmem:[%s5 + $0x8] sm:$0xff]
    %v232 = vmul.f32 %v230, %v230
    %v233 = vmul.f32 %v231, %v231
    %v234 = vsel %vm30, %v232, 0.0
    %v235 = vrot.slane %v234, 4
    %v236 = vadd.f32 %v234, %v235
    %v237 = vrot.slane %v236, 2
    %v238 = vadd.f32 %v236, %v237
    %v239 = vrot.slane %v238, 1
    %v240 = vadd.f32 %v238, %v239
    %v241 = vsel %vm30, %v233, 0.0
    %v242 = vrot.slane %v241, 4
    %v243 = vadd.f32 %v241, %v242
    %v244 = vrot.slane %v243, 2
    %v245 = vadd.f32 %v243, %v244
    %v246 = vrot.slane %v245, 1
    %v247 = vadd.f32 %v245, %v246
    %v248 = vmax.f32 %v240, 1e-24
    %v249 = vmax.f32 %v247, 1e-24
    %v250 = vrsqrt.pop %v248
    %v251 = vrsqrt.pop %v249
    %v252 = vmul.f32 %v230, %v250
    %v253 = vmul.f32 %v231, %v251
    %v254 = vsel %vm30, %v252, 0.0
    %v255 = vrot.slane %v254, 4
    %v256 = vadd.f32 %v254, %v255
    %v257 = vrot.slane %v256, 2
    %v258 = vadd.f32 %v256, %v257
    %v259 = vrot.slane %v258, 1
    %v260 = vadd.f32 %v258, %v259
    %v261 = vsel %vm30, %v253, 0.0
    %v262 = vrot.slane %v261, 4
    %v263 = vadd.f32 %v261, %v262
    %v264 = vrot.slane %v263, 2
    %v265 = vadd.f32 %v263, %v264
    %v266 = vrot.slane %v265, 1
    %v267 = vadd.f32 %v265, %v266
    %v268 = vrcp.pop 8.0
    %v269 = vmul.f32 %v260, %v268
    %v270 = vmul.f32 %v267, %v268
    %v271 = vmul.f32 %v269, %v269
    %v272 = vmul.f32 %v270, %v270
    %v275 = vsel %vm62, %v272, %v271
    %v277 = vsel %vm221, %v275, 0.0
    %278 = vadd.xlane.f32.xlu0 %v277
    %v279 = vpop.xlane.xlu0 %278
    %v280 = vmax.f32 %v279, 1e-24
    %v281 = vrsqrt.pop %v280
    %v283 = vrot.slane %v281, 1
    %v286 = vmul.f32 %v269, %v281
    %v287 = vmul.f32 %v270, %v283
    %v288 = vmul.f32 %v286, 10.0
    %v289 = vmul.f32 %v287, 10.0
    %v292 = vrot.slane %v289, 7
    %v293 = vsel %vm62, %v292, %v288
    %v295 = vsel %vm30, %v229, 0
    %v297 = vsel %vm30, %v293, 0
    %299 = vmatprep.subr.mxu0 0.0
    %300 = vmatpush1.xpose.msra.mxu0 %v297
    %301 = vmatprep.subr.mxu0 0.0
    %302 = vmatpush1.xpose.msra.mxu0 0.0
    %303 = vmatprep.subr.mxu0 0.0
    %304 = vmatpush1.xpose.msra.mxu0 0.0
    %305 = vmatprep.subr.mxu0 0.0
    %306 = vmatpush1.xpose.msra.mxu0 0.0
    %307 = vmatprep.subr.mxu0 0.0
    %308 = vmatpush1.xpose.msra.mxu0 0.0
    %309 = vmatprep.subr.mxu0 0.0
    %310 = vmatpush1.xpose.msra.mxu0 0.0
    %311 = vmatprep.subr.mxu0 0.0
    %312 = vmatpush1.xpose.msra.mxu0 0.0
    %313 = vmatprep.subr.mxu0 0.0
    %314 = vmatpush1.xpose.msra.mxu0 0.0
    %315 = vmatprep.subr.mxu0 0.0
    %316 = vmatpush1.xpose.msra.mxu0 0.0
    %317 = vmatprep.subr.mxu0 0.0
    %318 = vmatpush1.xpose.msra.mxu0 0.0
    %319 = vmatprep.subr.mxu0 0.0
    %320 = vmatpush1.xpose.msra.mxu0 0.0
    %321 = vmatprep.subr.mxu0 0.0
    %322 = vmatpush1.xpose.msra.mxu0 0.0
    %323 = vmatprep.subr.mxu0 0.0
    %324 = vmatpush1.xpose.msra.mxu0 0.0
    %325 = vmatprep.subr.mxu0 0.0
    %326 = vmatpush1.xpose.msra.mxu0 0.0
    %327 = vmatprep.subr.mxu0 0.0
    %328 = vmatpush1.xpose.msra.mxu0 0.0
    %329 = vmatprep.subr.mxu0 0.0
    %330 = vmatpush1.xpose.msra.mxu0 0.0
    %331 = vmatprep.subr.mxu0 0.0
    %332 = vmatpush1.xpose.msra.mxu0 0.0
    %333 = vmatprep.subr.mxu0 0.0
    %334 = vmatpush1.xpose.msra.mxu0 0.0
    %335 = vmatprep.subr.mxu0 0.0
    %336 = vmatpush1.xpose.msra.mxu0 0.0
    %337 = vmatprep.subr.mxu0 0.0
    %338 = vmatpush1.xpose.msra.mxu0 0.0
    %339 = vmatprep.subr.mxu0 0.0
    %340 = vmatpush1.xpose.msra.mxu0 0.0
    %341 = vmatprep.subr.mxu0 0.0
    %342 = vmatpush1.xpose.msra.mxu0 0.0
    %343 = vmatprep.subr.mxu0 0.0
    %344 = vmatpush1.xpose.msra.mxu0 0.0
    %345 = vmatprep.subr.mxu0 0.0
    %346 = vmatpush1.xpose.msra.mxu0 0.0
    %347 = vmatprep.subr.mxu0 0.0
    %348 = vmatpush1.xpose.msra.mxu0 0.0
    %349 = vmatprep.subr.mxu0 0.0
    %350 = vmatpush1.xpose.msra.mxu0 0.0
    %351 = vmatprep.subr.mxu0 0.0
    %352 = vmatpush1.xpose.msra.mxu0 0.0
    %353 = vmatprep.subr.mxu0 0.0
    %354 = vmatpush1.xpose.msra.mxu0 0.0
    %355 = vmatprep.subr.mxu0 0.0
    %356 = vmatpush1.xpose.msra.mxu0 0.0
    %357 = vmatprep.subr.mxu0 0.0
    %358 = vmatpush1.xpose.msra.mxu0 0.0
    %359 = vmatprep.subr.mxu0 0.0
    %360 = vmatpush1.xpose.msra.mxu0 0.0
    %361 = vmatprep.subr.mxu0 0.0
    %362 = vmatpush1.xpose.msra.mxu0 0.0
    %363 = vmatprep.mubr.f32.mxu0 0.0
    %364 = vmatmul.mubr.f32.gmra.mrb[0].mxu0 %v295
    %v365 = vpop.f32.mrb[0].mxu0
    %v366 = vadd.f32 0.0, %v365
    %v367 = vpop.f32.mrb[0].mxu0
    %368 = vdwg.mxu0
    %vm369 = vcmask 9216
    %v370 = vsel %vm369, %v366, -inf
    %371 = vmax.xlane.f32.xlu0 %v370
    %v372 = vpop.xlane.xlu0 %371
    %v373 = vsub.f32 %v366, %v372
    %v374 = vmul.f32 %v373, 1.442695
    %v375 = vpow.pop %v374
    %v376 = vsel %vm369, %v375, 0.0
    %377 = vadd.xlane.f32.xlu0 %v376
    %v378 = vpop.xlane.xlu0 %377
    %v379 = vlog2.pop %v378
    %v380 = vmul.f32 %v379, 0.6931472
    %v381 = vadd.f32 %v372, %v380
    %v382 = vlaneseq
    %v383 = vshrl.u32 %v382, 7
    %v384 = vlaneseq
    %v385 = vand.u32 %v384, 127
    %vm386 = vcmp.eq.s32.totalorder %v383, %v385
    %v387 = vsel %vm386, %v366, 0.0
    %v388 = vsel %vm369, %v387, 0.0
    %389 = vadd.xlane.f32.xlu0 %v388
    %v390 = vpop.xlane.xlu0 %389
    %v391 = vsub.f32 %v381, %v390
    %vm392 = vcmask 1024
    %v393 = vsel %vm392, %v391, 0.0
    %394 = vadd.xlane.f32.xlu0 %v393
    %v395 = vpop.xlane.xlu0 %394
    %v396 = vrot.slane %v395, 4
    %v397 = vadd.f32 %v395, %v396
    %v398 = vrot.slane %v397, 2
    %v399 = vadd.f32 %v397, %v398
    %v400 = vrot.slane %v399, 1
    %v401 = vadd.f32 %v399, %v400
    %s402 = vtos %v401
    %v403 = vrcp.pop 2.0
    %s404 = vtos %v403
    %s405 = smul.f32 %s402, %s404
    %s406 = scalar_lea.smem [#allocation2], 0
    %407 = sst [smem:[%s406]] %s405
    // Predicated region
    $region26: #{dino_gpt_forward.2} parent=1 // pred_check
      _
    $region27: #{dino_gpt_forward.2} parent=1 // pred_check_branch
      %409 = sbr.rel (0) target = $region29
    $region28: #{dino_gpt_forward.2} parent=1 // pred_region
      _
    $region29: #{dino_gpt_forward.2} parent=1 // pred_fallthru
      _
    // Predicated region
    $region30: #{dino_gpt_forward.2} parent=1 // pred_check
      _
    $region31: #{dino_gpt_forward.2} parent=1 // pred_check_branch
      %411 = sbr.rel (0) target = $region33
    $region32: #{dino_gpt_forward.2} parent=1 // pred_region
      %s413 = ssub.s32 16, 16
      %414 = vsyncadd [#allocation3], %s413
      %417 = dma.smem_to_hbm [#allocation2], 16, %s7, [#allocation3]
    $region33: #{dino_gpt_forward.2} parent=1 // pred_fallthru
      _
    // Predicated region
    $region34: #{dino_gpt_forward.2} parent=1 // pred_check
      _
    $region35: #{dino_gpt_forward.2} parent=1 // pred_check_branch
      %419 = sbr.rel (0) target = $region37
    $region36: #{dino_gpt_forward.2} parent=1 // pred_region
      _
    $region37: #{dino_gpt_forward.2} parent=1 // pred_fallthru
      _
    // Predicated region
    $region38: #{dino_gpt_forward.2} parent=1 // pred_check
      _
    $region39: #{dino_gpt_forward.2} parent=1 // pred_check_branch
      %421 = sbr.rel (0) target = $region41
    $region40: #{dino_gpt_forward.2} parent=1 // pred_region
      %422 = dma.done [#allocation3], 16
    $region41: #{dino_gpt_forward.2} parent=1 // pred_fallthru
      _
    %423 = sfence
    %424 = vsyncpa [#allocation3], 1

// kernel: dino_gpt_forward.3
$region0: #{dino_gpt_forward.3}
  #allocation0 [shape = 'u32[]', space=smem, size = 0x4, offset = 0x4, fixed_abs, tag = 'smem constant byte address 0x4 - core index']
  #allocation1 [shape = 'u32[144,128]{1,0:T(1,128)}', space=vmem, size = 0x12000, scoped, tag = 'internal scratch']
  #allocation2 [shape = 'f32[16,1]{1,0:T(8,128)}', space=vmem, size = 0x2000, scoped, tag = 'scratch operand']
  #allocation3 [shape = 'f32[16,1]{1,0:T(8,128)}', space=vmem, size = 0x2000, scoped, tag = 'scratch operand']
  #allocation4 [shape = 'f32[1,1]{1,0:T(1,128)S(6)}', space=smem, size = 0x200, scoped, tag = 'scoped memory for dino_gpt_forward.3']
  %s0 = inlined_call_operand.vmem [shape: bf16[16,32], index: 0, kind: input, shape index: {}]
  %s1 = inlined_call_operand.vmem [shape: bf16[512,32], index: 1, kind: input, shape index: {}]
  %s2 = inlined_call_operand.vmem [shape: f32[16,1], index: 2, kind: input, shape index: {}]
  %s3 = inlined_call_operand.vmem [shape: f32[16,1], index: 3, kind: input, shape index: {}]
  %s4 = inlined_call_operand.<no memory space> [shape: f32[1,1], index: 4, kind: input, shape index: {}]
  %s5 = inlined_call_operand.hbm [shape: f32[1,1], index: 5, kind: output, shape index: {}]
  %s6 = sld [smem:[#allocation0]]
  $region61: #{dino_gpt_forward.3} parent=0
    _
  %s8 = ssub.s32 1, %s6
  %s9 = scalar_select 0, %s8, %s6
  %10 = sst [smem:[#allocation4]] %s4
  $region1: #{dino_gpt_forward.3} parent=0
    #allocation5 [shape = 'u8[512]{0}', space=smem, size = 0x200, scoped, tag = 'output window, operand 0, single buffered']
    #allocation6 [shape = 's32[2]{0}', space=sflag, size = 0x8, scoped, tag = 'scoped memory for dino_gpt_forward.3']
    %11 = vsyncpa [#allocation6], 0
    loop: start=0, step=1, limit=6
    $region2: #{dino_gpt_forward.3} parent=1 // loop_pre_header
      _
    $region3: #{dino_gpt_forward.3} parent=1 // loop_header
      %s13 = sphi 0, %s17
      %p14 = scmp.ge.s32.totalorder %s13, 6
      %s21 = sphi 0, %s21
      %s23 = sphi 0, %s21
      %s24 = sphi 0, %s23
      %s38 = sphi 0, %s24
      %s44 = sphi 0, %s46
      %s47 = sphi 0, %s44
      %s48 = sphi 0, %s47
      %s64 = sphi 0, %s48
      %s68 = sphi 0, %s68
      %s70 = sphi 0, %s68
      %s71 = sphi 0, %s70
      %s85 = sphi 0, %s71
      %s89 = sphi 0, %s89
      %s91 = sphi 0, %s89
      %s92 = sphi 0, %s91
      %s106 = sphi 0, %s92
      %s110 = sphi 0, %s110
      %s112 = sphi 0, %s110
      %s113 = sphi 0, %s112
      %s127 = sphi 0, %s113
      %s131 = sphi 0, %s131
      %s133 = sphi 0, %s131
      %s134 = sphi 0, %s133
      %s148 = sphi 0, %s134
    $region4: #{dino_gpt_forward.3} parent=1 // loop_header_branch
      %16 = sbr.rel (%p14) target = $region8
    $region5: #{dino_gpt_forward.3} parent=1 // loop_body
      %s18 = ssub.s32 %s13, 1
      %s19 = ssub.s32 %s13, 2
      %s20 = sadd.s32 %s13, 1
      %s22 = sadd.s32 %s21, 1
      %p25 = scmp.eq.s32.totalorder %s13, 3
      %p26 = scmp.ne.s32.totalorder %s21, %s23
      %p27 = scmp.eq.s32.totalorder %s13, 0
      %p28 = por %p26, %p27
      %p29 = scmp.ne.s32.totalorder %s21, %s23
      %p30 = scmp.eq.s32.totalorder %s18, 3
      %p31 = por %p29, %p30
      %p32 = scmp.ne.s32.totalorder %s23, %s24
      %p33 = scmp.eq.s32.totalorder %s18, 0
      %p34 = por %p32, %p33
      %p35 = scmp.ne.s32.totalorder %s23, %s24
      %p36 = scmp.eq.s32.totalorder %s19, 3
      %p37 = por %p35, %p36
      %p39 = scmp.ne.s32.totalorder %s24, %s38
      %p40 = scmp.eq.s32.totalorder %s19, 0
      %p41 = por %p39, %p40
      %s42 = ssub.s32 %s13, %s20
      %p43 = scmp.eq.s32.totalorder %s42, 0
      %s45 = sadd.s32 %s44, 1
      %s46 = scalar_select %p43, %s44, %s45
      %p49 = pneg %p43
      %p50 = scmp.eq.s32.totalorder %s13, 3
      %p51 = por %p49, %p50
      %p52 = scmp.ne.s32.totalorder %s44, %s47
      %p53 = scmp.eq.s32.totalorder %s13, 0
      %p54 = por %p52, %p53
      %p55 = scmp.ne.s32.totalorder %s44, %s47
      %p56 = scmp.eq.s32.totalorder %s18, 3
      %p57 = por %p55, %p56
      %p58 = scmp.ne.s32.totalorder %s47, %s48
      %p59 = scmp.eq.s32.totalorder %s18, 0
      %p60 = por %p58, %p59
      %p61 = scmp.ne.s32.totalorder %s47, %s48
      %p62 = scmp.eq.s32.totalorder %s19, 3
      %p63 = por %p61, %p62
      %p65 = scmp.ne.s32.totalorder %s48, %s64
      %p66 = scmp.eq.s32.totalorder %s19, 0
      %p67 = por %p65, %p66
      %s69 = sadd.s32 %s68, 1
      %p72 = scmp.eq.s32.totalorder %s13, 3
      %p73 = scmp.ne.s32.totalorder %s68, %s70
      %p74 = scmp.eq.s32.totalorder %s13, 0
      %p75 = por %p73, %p74
      %p76 = scmp.ne.s32.totalorder %s68, %s70
      %p77 = scmp.eq.s32.totalorder %s18, 3
      %p78 = por %p76, %p77
      %p79 = scmp.ne.s32.totalorder %s70, %s71
      %p80 = scmp.eq.s32.totalorder %s18, 0
      %p81 = por %p79, %p80
      %p82 = scmp.ne.s32.totalorder %s70, %s71
      %p83 = scmp.eq.s32.totalorder %s19, 3
      %p84 = por %p82, %p83
      %p86 = scmp.ne.s32.totalorder %s71, %s85
      %p87 = scmp.eq.s32.totalorder %s19, 0
      %p88 = por %p86, %p87
      %s90 = sadd.s32 %s89, 1
      %p93 = scmp.eq.s32.totalorder %s13, 3
      %p94 = scmp.ne.s32.totalorder %s89, %s91
      %p95 = scmp.eq.s32.totalorder %s13, 0
      %p96 = por %p94, %p95
      %p97 = scmp.ne.s32.totalorder %s89, %s91
      %p98 = scmp.eq.s32.totalorder %s18, 3
      %p99 = por %p97, %p98
      %p100 = scmp.ne.s32.totalorder %s91, %s92
      %p101 = scmp.eq.s32.totalorder %s18, 0
      %p102 = por %p100, %p101
      %p103 = scmp.ne.s32.totalorder %s91, %s92
      %p104 = scmp.eq.s32.totalorder %s19, 3
      %p105 = por %p103, %p104
      %p107 = scmp.ne.s32.totalorder %s92, %s106
      %p108 = scmp.eq.s32.totalorder %s19, 0
      %p109 = por %p107, %p108
      %s111 = sadd.s32 %s110, 1
      %p114 = scmp.eq.s32.totalorder %s13, 3
      %p115 = scmp.ne.s32.totalorder %s110, %s112
      %p116 = scmp.eq.s32.totalorder %s13, 0
      %p117 = por %p115, %p116
      %p118 = scmp.ne.s32.totalorder %s110, %s112
      %p119 = scmp.eq.s32.totalorder %s18, 3
      %p120 = por %p118, %p119
      %p121 = scmp.ne.s32.totalorder %s112, %s113
      %p122 = scmp.eq.s32.totalorder %s18, 0
      %p123 = por %p121, %p122
      %p124 = scmp.ne.s32.totalorder %s112, %s113
      %p125 = scmp.eq.s32.totalorder %s19, 3
      %p126 = por %p124, %p125
      %p128 = scmp.ne.s32.totalorder %s113, %s127
      %p129 = scmp.eq.s32.totalorder %s19, 0
      %p130 = por %p128, %p129
      %s132 = sadd.s32 %s131, 1
      %p135 = scmp.eq.s32.totalorder %s13, 3
      %p136 = scmp.ne.s32.totalorder %s131, %s133
      %p137 = scmp.eq.s32.totalorder %s13, 0
      %p138 = por %p136, %p137
      %p139 = scmp.ne.s32.totalorder %s131, %s133
      %p140 = scmp.eq.s32.totalorder %s18, 3
      %p141 = por %p139, %p140
      %p142 = scmp.ne.s32.totalorder %s133, %s134
      %p143 = scmp.eq.s32.totalorder %s18, 0
      %p144 = por %p142, %p143
      %p145 = scmp.ne.s32.totalorder %s133, %s134
      %p146 = scmp.eq.s32.totalorder %s19, 3
      %p147 = por %p145, %p146
      %p149 = scmp.ne.s32.totalorder %s134, %s148
      %p150 = scmp.eq.s32.totalorder %s19, 0
      %p151 = por %p149, %p150
      %p152 = scmp.le.s32.totalorder 1, %s13
      %p153 = scmp.lt.s32.totalorder %s13, 5
      %p154 = pnand %p152, %p153
      %p155 = pneg %p154
      // Predicated region
      $region9: #{dino_gpt_forward.3} parent=5 // pred_check
        _
      $region10: #{dino_gpt_forward.3} parent=5 // pred_check_branch
        %157 = sbr.rel (%p154) target = $region12
      $region11: #{dino_gpt_forward.3} parent=5 // pred_region
        %s158 = ssub.s32 %s13, 1
        // Predicated region
        $region13: #{dino_gpt_forward.3} parent=11 // pred_check
          %p159 = pneg %p34
        $region14: #{dino_gpt_forward.3} parent=11 // pred_check_branch
          %161 = sbr.rel (%p159) target = $region16
        $region15: #{dino_gpt_forward.3} parent=11 // pred_region
          _
        $region16: #{dino_gpt_forward.3} parent=11 // pred_fallthru
          _
        // Predicated region
        $region17: #{dino_gpt_forward.3} parent=11 // pred_check
          %p162 = pneg %p81
        $region18: #{dino_gpt_forward.3} parent=11 // pred_check_branch
          %164 = sbr.rel (%p162) target = $region20
        $region19: #{dino_gpt_forward.3} parent=11 // pred_region
          _
        $region20: #{dino_gpt_forward.3} parent=11 // pred_fallthru
          _
        // Predicated region
        $region21: #{dino_gpt_forward.3} parent=11 // pred_check
          %p165 = pneg %p102
        $region22: #{dino_gpt_forward.3} parent=11 // pred_check_branch
          %167 = sbr.rel (%p165) target = $region24
        $region23: #{dino_gpt_forward.3} parent=11 // pred_region
          _
        $region24: #{dino_gpt_forward.3} parent=11 // pred_fallthru
          _
        // Predicated region
        $region25: #{dino_gpt_forward.3} parent=11 // pred_check
          %p168 = pneg %p123
        $region26: #{dino_gpt_forward.3} parent=11 // pred_check_branch
          %170 = sbr.rel (%p168) target = $region28
        $region27: #{dino_gpt_forward.3} parent=11 // pred_region
          _
        $region28: #{dino_gpt_forward.3} parent=11 // pred_fallthru
          _
      $region12: #{dino_gpt_forward.3} parent=5 // pred_fallthru
        _
      %p171 = scmp.lt.s32.totalorder %s13, 4
      // Predicated region
      $region29: #{dino_gpt_forward.3} parent=5 // pred_check
        %p172 = pneg %p171
      $region30: #{dino_gpt_forward.3} parent=5 // pred_check_branch
        %174 = sbr.rel (%p172) target = $region32
      $region31: #{dino_gpt_forward.3} parent=5 // pred_region
        // Predicated region
        $region33: #{dino_gpt_forward.3} parent=31 // pred_check
          %p175 = pneg %p54
        $region34: #{dino_gpt_forward.3} parent=31 // pred_check_branch
          %177 = sbr.rel (%p175) target = $region36
        $region35: #{dino_gpt_forward.3} parent=31 // pred_region
          %s178 = smul.u32 16, %s13
          %p179 = scmp.lt.s32.totalorder %s178, 63
          %s180 = scalar_select %p179, %s178, 63
          %s181 = smul.addr %s180, 4
          %s182 = scalar_lea.vmem %s1, %s181
          %s183 = smul.u32 16, %s13
        $region36: #{dino_gpt_forward.3} parent=31 // pred_fallthru
          _
      $region32: #{dino_gpt_forward.3} parent=5 // pred_fallthru
        _
      %p184 = scmp.le.s32.totalorder 1, %s13
      %p185 = scmp.lt.s32.totalorder %s13, 5
      %p186 = pnand %p184, %p185
      %p187 = pneg %p186
      // Predicated region
      $region37: #{dino_gpt_forward.3} parent=5 // pred_check
        _
      $region38: #{dino_gpt_forward.3} parent=5 // pred_check_branch
        %189 = sbr.rel (%p186) target = $region40
      $region39: #{dino_gpt_forward.3} parent=5 // pred_region
        %s190 = ssub.s32 %s13, 1
        %p191 = pneg %p34
        %p192 = pneg %p31
        %s193 = smul.u32 16, %s18
        %p194 = scmp.lt.s32.totalorder %s193, 63
        %s195 = scalar_select %p194, %s193, 63
        %s196 = smul.addr %s195, 4
        %s197 = scalar_lea.vmem %s1, %s196
        %p198 = pneg %p60
        %p199 = pneg %p57
        %p200 = pneg %p81
        %p201 = pneg %p78
        %p202 = pneg %p102
        %p203 = pneg %p99
        %p204 = pneg %p123
        %p205 = pneg %p120
        %p206 = pneg %p144
        %p207 = pneg %p141
        %s208 = smul.u32 16, %s18
        %p209 = scmp.lt.s32.totalorder %s208, 63
        %s210 = scalar_select %p209, %s208, 63
        %s211 = smul.addr %s210, 4
        %s212 = scalar_lea.vmem %s1, %s211
        %s213 = smul.u32 16, %s18
        %p215 = scmp.eq.s32.totalorder %s18, 0
        // Predicated region
        $region41: #{dino_gpt_forward.3} parent=39 // pred_check
          %p216 = pneg %p215
        $region42: #{dino_gpt_forward.3} parent=39 // pred_check_branch
          %218 = sbr.rel (%p216) target = $region44
        $region43: #{dino_gpt_forward.3} parent=39 // pred_region
          %vm219 = vcmask 7168
          %220 = vst.msk [vmem:[#allocation2] sm:$0xff] %vm219, -inf
          %221 = vst.msk [vmem:[#allocation2 + $0x8] sm:$0xff] %vm219, -inf
          %222 = vst.msk [vmem:[#allocation3] sm:$0xff] %vm219, 0.0
          %223 = vst.msk [vmem:[#allocation3 + $0x8] sm:$0xff] %vm219, 0.0
        $region44: #{dino_gpt_forward.3} parent=39 // pred_fallthru
          _
        %v224 = vld [vmem:[%s0] sm:$0xf]
        %v225 = vld [vmem:[%s0 + $0x4] sm:$0xf]
        %v226 = vld [vmem:[%s212] sm:$0xf]
        %v227 = vld [vmem:[%s212 + $0x4] sm:$0xf]
        %v228 = vld [vmem:[%s212 + $0x8] sm:$0xf]
        %v229 = vld [vmem:[%s212 + $0xc] sm:$0xf]
        %v230 = vld [vmem:[%s212 + $0x10] sm:$0xf]
        %v231 = vld [vmem:[%s212 + $0x14] sm:$0xf]
        %v232 = vld [vmem:[%s212 + $0x18] sm:$0xf]
        %v233 = vld [vmem:[%s212 + $0x1c] sm:$0xf]
        %v234 = vld [vmem:[%s212 + $0x20] sm:$0xf]
        %v235 = vld [vmem:[%s212 + $0x24] sm:$0xf]
        %v236 = vld [vmem:[%s212 + $0x28] sm:$0xf]
        %v237 = vld [vmem:[%s212 + $0x2c] sm:$0xf]
        %v238 = vld [vmem:[%s212 + $0x30] sm:$0xf]
        %v239 = vld [vmem:[%s212 + $0x34] sm:$0xf]
        %v240 = vld [vmem:[%s212 + $0x38] sm:$0xf]
        %v241 = vld [vmem:[%s212 + $0x3c] sm:$0xf]
        %v244 = vunpack.c.l.b16 %v224
        %v245 = vunpack.c.l.b16 %v225
        %v246 = vpack.c.b16 %v245, %v244
        %v263 = vunpack.c.l.b16 %v226
        %v264 = vunpack.c.l.b16 %v227
        %v265 = vunpack.c.l.b16 %v228
        %v266 = vunpack.c.l.b16 %v229
        %v267 = vunpack.c.l.b16 %v230
        %v268 = vunpack.c.l.b16 %v231
        %v269 = vunpack.c.l.b16 %v232
        %v270 = vunpack.c.l.b16 %v233
        %v271 = vunpack.c.l.b16 %v234
        %v272 = vunpack.c.l.b16 %v235
        %v273 = vunpack.c.l.b16 %v236
        %v274 = vunpack.c.l.b16 %v237
        %v275 = vunpack.c.l.b16 %v238
        %v276 = vunpack.c.l.b16 %v239
        %v277 = vunpack.c.l.b16 %v240
        %v278 = vunpack.c.l.b16 %v241
        %v279 = vpack.c.b16 %v264, %v263
        %v280 = vpack.c.b16 %v266, %v265
        %v281 = vpack.c.b16 %v268, %v267
        %v282 = vpack.c.b16 %v270, %v269
        %v283 = vpack.c.b16 %v272, %v271
        %v284 = vpack.c.b16 %v274, %v273
        %v285 = vpack.c.b16 %v276, %v275
        %v286 = vpack.c.b16 %v278, %v277
        %vm287 = vcmask 261120
        %v289 = vsel %vm287, %v246, 0
        %v292 = vsel %vm287, %v279, 0
        %v295 = vsel %vm287, %v280, 0
        %v298 = vsel %vm287, %v281, 0
        %v301 = vsel %vm287, %v282, 0
        %v304 = vsel %vm287, %v283, 0
        %v307 = vsel %vm287, %v284, 0
        %v310 = vsel %vm287, %v285, 0
        %v313 = vsel %vm287, %v286, 0
        %315 = vmatprep.subr.bf16.mxu0 0
        %316 = vmatpush1.bf16.xpose.msra.mxu0 %v292
        %317 = vmatprep.subr.bf16.mxu0 0
        %318 = vmatpush1.bf16.xpose.msra.mxu0 %v295
        %319 = vmatprep.subr.bf16.mxu0 0
        %320 = vmatpush1.bf16.xpose.msra.mxu0 %v298
        %321 = vmatprep.subr.bf16.mxu0 0
        %322 = vmatpush1.bf16.xpose.msra.mxu0 %v301
        %323 = vmatprep.subr.bf16.mxu0 0
        %324 = vmatpush1.bf16.xpose.msra.mxu0 %v304
        %325 = vmatprep.subr.bf16.mxu0 0
        %326 = vmatpush1.bf16.xpose.msra.mxu0 %v307
        %327 = vmatprep.subr.bf16.mxu0 0
        %328 = vmatpush1.bf16.xpose.msra.mxu0 %v310
        %329 = vmatprep.subr.bf16.mxu0 0
        %330 = vmatpush1.bf16.xpose.msra.mxu0 %v313
        %331 = vmatprep.subr.bf16.mxu0 0
        %332 = vmatpush1.bf16.xpose.msra.mxu0 0
        %333 = vmatprep.subr.bf16.mxu0 0
        %334 = vmatpush1.bf16.xpose.msra.mxu0 0
        %335 = vmatprep.subr.bf16.mxu0 0
        %336 = vmatpush1.bf16.xpose.msra.mxu0 0
        %337 = vmatprep.subr.bf16.mxu0 0
        %338 = vmatpush1.bf16.xpose.msra.mxu0 0
        %339 = vmatprep.subr.bf16.mxu0 0
        %340 = vmatpush1.bf16.xpose.msra.mxu0 0
        %341 = vmatprep.subr.bf16.mxu0 0
        %342 = vmatpush1.bf16.xpose.msra.mxu0 0
        %343 = vmatprep.subr.bf16.mxu0 0
        %344 = vmatpush1.bf16.xpose.msra.mxu0 0
        %345 = vmatprep.subr.bf16.mxu0 0
        %346 = vmatpush1.bf16.xpose.msra.mxu0 0
        %347 = vmatprep.mubr.bf16.mxu0 0
        %348 = vmatmul.mubr.bf16.gmra.mrb[0].mxu0 %v289
        %v349 = vpop.f32.mrb[0].mxu0
        %v350 = vadd.f32 0.0, %v349
        %v351 = vpop.f32.mrb[0].mxu0
        %v352 = vpop.f32.mrb[0].mxu0
        %v353 = vadd.f32 0.0, %v352
        %v354 = vpop.f32.mrb[0].mxu0
        %355 = vdwg.mxu0
        %v356 = vld [vmem:[#allocation2] sm:$0xff]
        %v357 = vld [vmem:[#allocation2 + $0x8] sm:$0xff]
        %358 = vmax.xlane.f32.xlu0 %v350
        %v359 = vpop.xlane.xlu0 %358
        %360 = vmax.xlane.f32.xlu0 %v353
        %v361 = vpop.xlane.xlu0 %360
        %v362 = vmax.f32 %v356, %v359
        %v363 = vmax.f32 %v357, %v361
        %v364 = vld [vmem:[#allocation3] sm:$0xff]
        %v365 = vld [vmem:[#allocation3 + $0x8] sm:$0xff]
        %v366 = vsub.f32 %v356, %v362
        %v367 = vsub.f32 %v357, %v363
        %v368 = vmul.f32 %v366, 1.442695
        %v369 = vpow.pop %v368
        %v370 = vmul.f32 %v367, 1.442695
        %v371 = vpow.pop %v370
        %v372 = vmul.f32 %v364, %v369
        %v373 = vmul.f32 %v365, %v371
        %375 = vset.pattern.permute.xlu0 0
        %376 = vperm.xlu0 %375, %v362
        %v377 = vpop.permute.xlu0 %376
        %380 = vset.pattern.permute.xlu0 0
        %381 = vperm.xlu0 %380, %v363
        %v382 = vpop.permute.xlu0 %381
        %v384 = vsub.f32 %v350, %v377
        %v385 = vsub.f32 %v353, %v382
        %v386 = vmul.f32 %v384, 1.442695
        %v387 = vpow.pop %v386
        %v388 = vmul.f32 %v385, 1.442695
        %v389 = vpow.pop %v388
        %390 = vadd.xlane.f32.xlu0 %v387
        %v391 = vpop.xlane.xlu0 %390
        %392 = vadd.xlane.f32.xlu0 %v389
        %v393 = vpop.xlane.xlu0 %392
        %v394 = vadd.f32 %v372, %v391
        %v395 = vadd.f32 %v373, %v393
        %vm396 = vcmask 7168
        %397 = vst.msk [vmem:[#allocation3] sm:$0xff] %vm396, %v394
        %398 = vst.msk [vmem:[#allocation3 + $0x8] sm:$0xff] %vm396, %v395
        %399 = vst.msk [vmem:[#allocation2] sm:$0xff] %vm396, %v362
        %400 = vst.msk [vmem:[#allocation2 + $0x8] sm:$0xff] %vm396, %v363
        %p401 = scmp.eq.s32.totalorder %s18, 3
        // Predicated region
        $region45: #{dino_gpt_forward.3} parent=39 // pred_check
          %p402 = pneg %p401
        $region46: #{dino_gpt_forward.3} parent=39 // pred_check_branch
          %404 = sbr.rel (%p402) target = $region48
        $region47: #{dino_gpt_forward.3} parent=39 // pred_region
          %v405 = vld [vmem:[#allocation2] sm:$0xff]
          %v406 = vld [vmem:[#allocation2 + $0x8] sm:$0xff]
          %v407 = vld [vmem:[#allocation3] sm:$0xff]
          %v408 = vld [vmem:[#allocation3 + $0x8] sm:$0xff]
          %v409 = vlog2.pop %v407
          %v410 = vmul.f32 %v409, 0.6931472
          %v411 = vlog2.pop %v408
          %v412 = vmul.f32 %v411, 0.6931472
          %v413 = vadd.f32 %v405, %v410
          %v414 = vadd.f32 %v406, %v412
          %v415 = vld [vmem:[%s3] sm:$0xff]
          %v416 = vld [vmem:[%s3 + $0x8] sm:$0xff]
          %v417 = vld [vmem:[%s2] sm:$0xff]
          %v418 = vld [vmem:[%s2 + $0x8] sm:$0xff]
          %v419 = vsub.f32 %v413, %v417
          %v420 = vsub.f32 %v414, %v418
          %v421 = vmul.f32 %v415, %v419
          %v422 = vmul.f32 %v416, %v420
          %v423 = vsel %vm396, %v421, 0.0
          %v424 = vsel %vm396, %v422, 0.0
          %v425 = vadd.f32 %v423, %v424
          %426 = vadd.xlane.f32.xlu0 %v425
          %v427 = vpop.xlane.xlu0 %426
          %v428 = vrot.slane %v427, 4
          %v429 = vadd.f32 %v427, %v428
          %v430 = vrot.slane %v429, 2
          %v431 = vadd.f32 %v429, %v430
          %v432 = vrot.slane %v431, 1
          %v433 = vadd.f32 %v431, %v432
          %s434 = vtos %v433
          %v435 = vsel %vm396, %v415, 0.0
          %v436 = vsel %vm396, %v416, 0.0
          %v437 = vadd.f32 %v435, %v436
          %438 = vadd.xlane.f32.xlu0 %v437
          %v439 = vpop.xlane.xlu0 %438
          %v440 = vrot.slane %v439, 4
          %v441 = vadd.f32 %v439, %v440
          %v442 = vrot.slane %v441, 2
          %v443 = vadd.f32 %v441, %v442
          %v444 = vrot.slane %v443, 1
          %v445 = vadd.f32 %v443, %v444
          %s446 = vtos %v445
          %s447 = smax.f32 %s446, 1.0
          %v448 = vstv %s447
          %v449 = vrcp.pop %v448
          %s450 = vtos %v449
          %s451 = smul.f32 %s434, %s450
          %s452 = sld [smem:[#allocation4]]
          %s453 = smul.f32 %s452, 0.1
          %s454 = sadd.f32 %s451, %s453
          %s455 = scalar_lea.smem [#allocation5], 0
          %456 = sst [smem:[%s455]] %s454
        $region48: #{dino_gpt_forward.3} parent=39 // pred_fallthru
          _
        // Predicated region
        $region49: #{dino_gpt_forward.3} parent=39 // pred_check
          %p457 = pneg %p141
        $region50: #{dino_gpt_forward.3} parent=39 // pred_check_branch
          %459 = sbr.rel (%p457) target = $region52
        $region51: #{dino_gpt_forward.3} parent=39 // pred_region
          %s461 = ssub.s32 16, 16
          %462 = vsyncadd [#allocation6], %s461
          %465 = dma.smem_to_hbm [#allocation5], 16, %s5, [#allocation6]
        $region52: #{dino_gpt_forward.3} parent=39 // pred_fallthru
          _
        // Predicated region
        $region53: #{dino_gpt_forward.3} parent=39 // pred_check
          %p466 = pneg %p141
        $region54: #{dino_gpt_forward.3} parent=39 // pred_check_branch
          %468 = sbr.rel (%p466) target = $region56
        $region55: #{dino_gpt_forward.3} parent=39 // pred_region
          %469 = dma.done [#allocation6], 16
        $region56: #{dino_gpt_forward.3} parent=39 // pred_fallthru
          _
        %470 = sfence
      $region40: #{dino_gpt_forward.3} parent=5 // pred_fallthru
        _
      %p471 = scmp.le.s32.totalorder 2, %s13
      // Predicated region
      $region57: #{dino_gpt_forward.3} parent=5 // pred_check
        %p472 = pneg %p471
      $region58: #{dino_gpt_forward.3} parent=5 // pred_check_branch
        %474 = sbr.rel (%p472) target = $region60
      $region59: #{dino_gpt_forward.3} parent=5 // pred_region
        %s475 = ssub.s32 %s13, 2
      $region60: #{dino_gpt_forward.3} parent=5 // pred_fallthru
        _
    $region6: #{dino_gpt_forward.3} parent=1 // loop_footer
      %s17 = sadd.s32 1, %s13
    $region7: #{dino_gpt_forward.3} parent=1 // loop_footer_branch
      %12 = sbr.rel target = $region3
    $region8: #{dino_gpt_forward.3} parent=1 // loop_exit
      _
    %476 = vsyncpa [#allocation6], 1
    %s477 = scalar_lea.sflag [#allocation6], 1
    %478 = vsyncpa %s477, 1

</llo_original>
